<compile_context>
chip_gen: v7x
topology: tpu7x:2x2x1
jax: 0.10.0
libtpu: 0.0.40
codegen_flags: <defaults>
</compile_context>

<pallas_src>
import functools

import jax
import jax.numpy as jnp
from jax.experimental import pallas as pl
from jax.experimental.pallas import tpu as pltpu


def _mlp_kernel(xT_ref, w1_ref, b1_ref, w2_ref, b2_ref, w3_ref, b3_ref, o_ref):
    # Fused forward on one batch tile (all f32, f32 MXU accumulation).
    xT = xT_ref[...]                                                   # (3, blk)
    h1 = jnp.dot(w1_ref[...], xT, preferred_element_type=jnp.float32)  # (64, blk)
    h1 = jnp.maximum(h1 + b1_ref[...], 0.0)
    h2 = jnp.dot(w2_ref[...], h1, preferred_element_type=jnp.float32)  # (64, blk)
    h2 = jnp.maximum(h2 + b2_ref[...], 0.0)
    out = jnp.dot(w3_ref[...], h2, preferred_element_type=jnp.float32) # (1, blk)
    out = out + b3_ref[0, 0]                                           # scalar bias from SMEM
    o_ref[...] = out.astype(o_ref.dtype)                               # lane-dense store


def _round_up(n, m):
    return ((n + m - 1) // m) * m


@functools.partial(jax.jit, static_argnames=("block_b",))
def simple_net_forward(x, params, *, block_b=512):
    """x: (B, 3) float32.  params (PyTorch layout):
       w1 (64,3), b1 (64,1), w2 (64,64), b2 (64,1), w3 (1,64), b3 (1,1)."""
    B, Fin = x.shape
    w1, b1 = params["w1"], params["b1"]
    w2, b2 = params["w2"], params["b2"]
    w3, b3 = params["w3"], params["b3"]

    # Batch tile: multiple of 128 lanes; don't over-pad small batches.
    blk = min(block_b, _round_up(B, 128))
    blk = max(128, _round_up(blk, 128))
    Bp = _round_up(B, blk)
    grid = (Bp // blk,)

    # Batch-on-lanes: transpose x to (Fin, B) and zero-pad batch to a tile multiple.
    xT = jnp.pad(x.T, ((0, 0), (0, Bp - B)))

    full = lambda arr: pl.BlockSpec(arr.shape, lambda i: (0,) * arr.ndim)

    outT = pl.pallas_call(
        _mlp_kernel,
        out_shape=jax.ShapeDtypeStruct((1, Bp), jnp.float32),
        grid_spec=pltpu.PrefetchScalarGridSpec(
            num_scalar_prefetch=0,
            grid=grid,
            in_specs=[
                pl.BlockSpec((Fin, blk), lambda i: (0, i)),           # x^T tile (lane-dense)
                full(w1), full(b1),                                   # (64,3), (64,1)
                full(w2), full(b2),                                   # (64,64), (64,1)
                full(w3),                                             # (1,64)
                pl.BlockSpec(memory_space=pltpu.MemorySpace.SMEM),    # b3 scalar in SMEM
            ],
            out_specs=pl.BlockSpec((1, blk), lambda i: (0, i)),       # lane-dense output
        ),
        compiler_params=pltpu.CompilerParams(
            # Batch grid axis is independent -> v7x can shard tiles across its 2 TCs.
            dimension_semantics=("parallel",),
        ),
    )(xT, w1, b1, w2, b2, w3, b3)

    return outT[:, :B].T  # (B, 1), matches PyTorch SimpleNet output


def init_params(key):
    """Deterministic synthetic params matching SimpleNet (PyTorch layout)."""
    k1, k2, k3, k4, k5, k6 = jax.random.split(key, 6)

    def lin(kw, kb, fan_in, fan_out):
        bound = 1.0 / jnp.sqrt(fan_in)
        w = jax.random.uniform(kw, (fan_out, fan_in), jnp.float32, -bound, bound)
        b = jax.random.uniform(kb, (fan_out, 1), jnp.float32, -bound, bound)
        return w, b

    w1, b1 = lin(k1, k2, 3, 64)
    w2, b2 = lin(k3, k4, 64, 64)
    w3, b3 = lin(k5, k6, 64, 1)
    return dict(w1=w1, b1=b1, w2=w2, b2=b2, w3=w3, b3=b3)


def reference_forward(x, params):
    h1 = jnp.maximum(x @ params["w1"].T + params["b1"].T, 0.0)
    h2 = jnp.maximum(h1 @ params["w2"].T + params["b2"].T, 0.0)
    return h2 @ params["w3"].T + params["b3"].T


if __name__ == "__main__":
    key = jax.random.PRNGKey(0)
    kx, kp, kx2 = jax.random.split(key, 3)
    params = init_params(kp)

    # Main case: batch large enough for >= 2 grid steps (keeps both v7x TCs busy).
    B = 1024
    x = jax.random.normal(kx, (B, 3), jnp.float32)
    out = jax.block_until_ready(simple_net_forward(x, params, block_b=512))
    ref = reference_forward(x, params)
    assert out.shape == (B, 1), out.shape
    assert jnp.allclose(out, ref, atol=1e-4, rtol=1e-5), "mismatch vs reference (B=1024)"

    # Ragged small batch: exercises the pad-to-tile + slice path.
    B2 = 37
    x2 = jax.random.normal(kx2, (B2, 3), jnp.float32)
    out2 = jax.block_until_ready(simple_net_forward(x2, params, block_b=512))
    ref2 = reference_forward(x2, params)
    assert out2.shape == (B2, 1), out2.shape
    assert jnp.allclose(out2, ref2, atol=1e-4, rtol=1e-5), "mismatch vs reference (B=37)"

    print("KERNEL_OK")
</pallas_src>

<mosaic_0001>
module attributes {stable_mosaic.version = 11 : i64} {
  func.func @_mlp_kernel(%arg0: i32, %arg1: memref<3x512xf32, #tpu.memory_space<vmem>>, %arg2: memref<64x3xf32, #tpu.memory_space<vmem>>, %arg3: memref<64x1xf32, #tpu.memory_space<vmem>>, %arg4: memref<64x64xf32, #tpu.memory_space<vmem>>, %arg5: memref<64x1xf32, #tpu.memory_space<vmem>>, %arg6: memref<1x64xf32, #tpu.memory_space<vmem>>, %arg7: memref<1x1xf32, #tpu.memory_space<smem>>, %arg8: memref<1x512xf32, #tpu.memory_space<vmem>>) attributes {dimension_semantics = [#tpu.dimension_semantics<parallel>], iteration_bounds = array<i64: 2>, scalar_prefetch = 0 : i64, scratch_operands = 0 : i64, tpu.core_type = #tpu.core_type<tc>, window_params = [{transform_indices = @transform_0, window_bounds = array<i64: 3, 512>}, {pipeline_mode = #tpu.pipeline_mode<synchronous>, transform_indices = @transform_1, window_bounds = array<i64: 64, 3>}, {pipeline_mode = #tpu.pipeline_mode<synchronous>, transform_indices = @transform_2, window_bounds = array<i64: 64, 1>}, {pipeline_mode = #tpu.pipeline_mode<synchronous>, transform_indices = @transform_3, window_bounds = array<i64: 64, 64>}, {pipeline_mode = #tpu.pipeline_mode<synchronous>, transform_indices = @transform_4, window_bounds = array<i64: 64, 1>}, {pipeline_mode = #tpu.pipeline_mode<synchronous>, transform_indices = @transform_5, window_bounds = array<i64: 1, 64>}, {transform_indices = @transform_6, window_bounds = array<i64: 1, 1>}, {transform_indices = @transform_7, window_bounds = array<i64: 1, 512>}]} {
    %c0 = arith.constant 0 : index
    %c0_0 = arith.constant 0 : index
    %0 = vector.load %arg1[%c0, %c0_0] : memref<3x512xf32, #tpu.memory_space<vmem>>, vector<3x512xf32>
    %c0_1 = arith.constant 0 : index
    %c0_2 = arith.constant 0 : index
    %1 = vector.load %arg2[%c0_1, %c0_2] : memref<64x3xf32, #tpu.memory_space<vmem>>, vector<64x3xf32>
    %cst = arith.constant dense<0.000000e+00> : vector<64x512xf32>
    %2 = tpu.matmul %1, %0, %cst {dimension_numbers = #tpu.dot_dimension_numbers<[1], [0], [0], [1], [0, 0, 1, 1], [], []>} : vector<64x3xf32>, vector<3x512xf32>, vector<64x512xf32> -> vector<64x512xf32>
    %c0_3 = arith.constant 0 : index
    %c0_4 = arith.constant 0 : index
    %3 = vector.load %arg3[%c0_3, %c0_4] : memref<64x1xf32, #tpu.memory_space<vmem>>, vector<64x1xf32>
    %4 = vector.broadcast %3 : vector<64x1xf32> to vector<64x512xf32>
    %5 = arith.addf %2, %4 : vector<64x512xf32>
    %cst_5 = arith.constant 0.000000e+00 : f32
    %6 = vector.broadcast %cst_5 : f32 to vector<64x512xf32>
    %7 = arith.maximumf %5, %6 : vector<64x512xf32>
    %c0_6 = arith.constant 0 : index
    %c0_7 = arith.constant 0 : index
    %8 = vector.load %arg4[%c0_6, %c0_7] : memref<64x64xf32, #tpu.memory_space<vmem>>, vector<64x64xf32>
    %cst_8 = arith.constant dense<0.000000e+00> : vector<64x512xf32>
    %9 = tpu.matmul %8, %7, %cst_8 {dimension_numbers = #tpu.dot_dimension_numbers<[1], [0], [0], [1], [0, 0, 1, 1], [], []>} : vector<64x64xf32>, vector<64x512xf32>, vector<64x512xf32> -> vector<64x512xf32>
    %c0_9 = arith.constant 0 : index
    %c0_10 = arith.constant 0 : index
    %10 = vector.load %arg5[%c0_9, %c0_10] : memref<64x1xf32, #tpu.memory_space<vmem>>, vector<64x1xf32>
    %11 = vector.broadcast %10 : vector<64x1xf32> to vector<64x512xf32>
    %12 = arith.addf %9, %11 : vector<64x512xf32>
    %cst_11 = arith.constant 0.000000e+00 : f32
    %13 = vector.broadcast %cst_11 : f32 to vector<64x512xf32>
    %14 = arith.maximumf %12, %13 : vector<64x512xf32>
    %c0_12 = arith.constant 0 : index
    %c0_13 = arith.constant 0 : index
    %15 = vector.load %arg6[%c0_12, %c0_13] : memref<1x64xf32, #tpu.memory_space<vmem>>, vector<1x64xf32>
    %cst_14 = arith.constant dense<0.000000e+00> : vector<1x512xf32>
    %16 = tpu.matmul %15, %14, %cst_14 {dimension_numbers = #tpu.dot_dimension_numbers<[1], [0], [0], [1], [0, 0, 1, 1], [], []>} : vector<1x64xf32>, vector<64x512xf32>, vector<1x512xf32> -> vector<1x512xf32>
    %c0_15 = arith.constant 0 : index
    %c0_16 = arith.constant 0 : index
    %17 = memref.load %arg7[%c0_15, %c0_16] : memref<1x1xf32, #tpu.memory_space<smem>>
    %18 = vector.broadcast %17 : f32 to vector<1x512xf32>
    %19 = arith.addf %16, %18 : vector<1x512xf32>
    %c0_17 = arith.constant 0 : index
    %c0_18 = arith.constant 0 : index
    %20 = vector.load %arg8[%c0_17, %c0_18] : memref<1x512xf32, #tpu.memory_space<vmem>>, vector<1x512xf32>
    tpu.vector_store %arg8[%c0_17, %c0_18], %19 {strides = array<i32>} : memref<1x512xf32, #tpu.memory_space<vmem>>, vector<1x512xf32>,
    return
  }
  func.func @transform_0(%arg0: i32) -> (i32, i32) {
    %c0_i32 = arith.constant 0 : i32
    %c0_i32_0 = arith.constant 0 : i32
    return %c0_i32, %arg0 : i32, i32
  }
  func.func @transform_1(%arg0: i32) -> (i32, i32) {
    %c0_i32 = arith.constant 0 : i32
    %c0_i32_0 = arith.constant 0 : i32
    %c0_i32_1 = arith.constant 0 : i32
    return %c0_i32, %c0_i32_0 : i32, i32
  }
  func.func @transform_2(%arg0: i32) -> (i32, i32) {
    %c0_i32 = arith.constant 0 : i32
    %c0_i32_0 = arith.constant 0 : i32
    %c0_i32_1 = arith.constant 0 : i32
    return %c0_i32, %c0_i32_0 : i32, i32
  }
  func.func @transform_3(%arg0: i32) -> (i32, i32) {
    %c0_i32 = arith.constant 0 : i32
    %c0_i32_0 = arith.constant 0 : i32
    %c0_i32_1 = arith.constant 0 : i32
    return %c0_i32, %c0_i32_0 : i32, i32
  }
  func.func @transform_4(%arg0: i32) -> (i32, i32) {
    %c0_i32 = arith.constant 0 : i32
    %c0_i32_0 = arith.constant 0 : i32
    %c0_i32_1 = arith.constant 0 : i32
    return %c0_i32, %c0_i32_0 : i32, i32
  }
  func.func @transform_5(%arg0: i32) -> (i32, i32) {
    %c0_i32 = arith.constant 0 : i32
    %c0_i32_0 = arith.constant 0 : i32
    %c0_i32_1 = arith.constant 0 : i32
    return %c0_i32, %c0_i32_0 : i32, i32
  }
  func.func @transform_6(%arg0: i32) -> (i32, i32) {
    %c0_i32 = arith.constant 0 : i32
    %c0_i32_0 = arith.constant 0 : i32
    %c0_i32_1 = arith.constant 0 : i32
    return %c0_i32, %c0_i32_0 : i32, i32
  }
  func.func @transform_7(%arg0: i32) -> (i32, i32) {
    %c0_i32 = arith.constant 0 : i32
    %c0_i32_0 = arith.constant 0 : i32
    return %c0_i32, %arg0 : i32, i32
  }
}

</mosaic_0001>

<llo_original>
// kernel: simple_net_forward.1
$region0: #{simple_net_forward.1}
  #allocation0 [shape = 'u32[]', space=smem, size = 0x4, offset = 0x4, fixed_abs, tag = 'smem constant byte address 0x4 - core index']
  #allocation1 [shape = 'u32[144,128]{1,0:T(1,128)}', space=vmem, size = 0x12000, scoped, tag = 'internal scratch']
  #allocation2 [shape = 'f32[1,1]{1,0:T(1,128)S(6)}', space=smem, size = 0x200, scoped, tag = 'scoped memory for simple_net_forward.1']
  %s0 = inlined_call_operand.vmem [shape: f32[3,1024], index: 0, kind: input, shape index: {}]
  %s1 = inlined_call_operand.vmem [shape: f32[64,3], index: 1, kind: input, shape index: {}]
  %s2 = inlined_call_operand.vmem [shape: f32[64,1], index: 2, kind: input, shape index: {}]
  %s3 = inlined_call_operand.vmem [shape: f32[64,64], index: 3, kind: input, shape index: {}]
  %s4 = inlined_call_operand.vmem [shape: f32[64,1], index: 4, kind: input, shape index: {}]
  %s5 = inlined_call_operand.vmem [shape: f32[1,64], index: 5, kind: input, shape index: {}]
  %s6 = inlined_call_operand.<no memory space> [shape: f32[1,1], index: 6, kind: input, shape index: {}]
  %s7 = inlined_call_operand.hbm [shape: f32[1,1024], index: 7, kind: output, shape index: {}]
  %s8 = sld [smem:[#allocation0]]
  $region61: #{simple_net_forward.1} parent=0
    _
  %s10 = ssub.s32 1, %s8
  %s11 = scalar_select 0, %s10, %s8
  %12 = sst [smem:[#allocation2]] %s6
  $region1: #{simple_net_forward.1} parent=0
    #allocation3 [shape = 'u8[4096]{0}', space=vmem, size = 0x1000, scoped, tag = 'output window, operand 0']
    #allocation4 [shape = 's32[2]{0}', space=sflag, size = 0x8, scoped, tag = 'scoped memory for simple_net_forward.1']
    %13 = vsyncpa [#allocation4], 0
    %s14 = scalar_lea.sflag [#allocation4], 1
    %15 = vsyncpa %s14, 0
    loop: start=0, step=1, limit=4
    $region2: #{simple_net_forward.1} parent=1 // loop_pre_header
      _
    $region3: #{simple_net_forward.1} parent=1 // loop_header
      %s17 = sphi 0, %s21
      %p18 = scmp.ge.s32.totalorder %s17, 4
      %s27 = sphi 0, %s29
      %s30 = sphi 0, %s27
      %s31 = sphi 0, %s30
      %s47 = sphi 0, %s31
      %s51 = sphi 0, %s51
      %s53 = sphi 0, %s51
      %s54 = sphi 0, %s53
      %s68 = sphi 0, %s54
      %s72 = sphi 0, %s72
      %s74 = sphi 0, %s72
      %s75 = sphi 0, %s74
      %s89 = sphi 0, %s75
      %s93 = sphi 0, %s93
      %s95 = sphi 0, %s93
      %s96 = sphi 0, %s95
      %s110 = sphi 0, %s96
      %s114 = sphi 0, %s114
      %s116 = sphi 0, %s114
      %s117 = sphi 0, %s116
      %s131 = sphi 0, %s117
      %s135 = sphi 0, %s135
      %s137 = sphi 0, %s135
      %s138 = sphi 0, %s137
      %s152 = sphi 0, %s138
      %s156 = sphi 0, %s156
      %s158 = sphi 0, %s156
      %s159 = sphi 0, %s158
      %s173 = sphi 0, %s159
      %s179 = sphi 0, %s181
      %s182 = sphi 0, %s179
      %s183 = sphi 0, %s182
      %s199 = sphi 0, %s183
    $region4: #{simple_net_forward.1} parent=1 // loop_header_branch
      %20 = sbr.rel (%p18) target = $region8
    $region5: #{simple_net_forward.1} parent=1 // loop_body
      %s22 = ssub.s32 %s17, 1
      %s23 = ssub.s32 %s17, 2
      %s24 = sadd.s32 %s17, 1
      %s25 = ssub.s32 %s17, %s24
      %p26 = scmp.eq.s32.totalorder %s25, 0
      %s28 = sadd.s32 %s27, 1
      %s29 = scalar_select %p26, %s27, %s28
      %p32 = pneg %p26
      %p33 = scmp.eq.s32.totalorder %s17, 1
      %p34 = por %p32, %p33
      %p35 = scmp.ne.s32.totalorder %s27, %s30
      %p36 = scmp.eq.s32.totalorder %s17, 0
      %p37 = por %p35, %p36
      %p38 = scmp.ne.s32.totalorder %s27, %s30
      %p39 = scmp.eq.s32.totalorder %s22, 1
      %p40 = por %p38, %p39
      %p41 = scmp.ne.s32.totalorder %s30, %s31
      %p42 = scmp.eq.s32.totalorder %s22, 0
      %p43 = por %p41, %p42
      %p44 = scmp.ne.s32.totalorder %s30, %s31
      %p45 = scmp.eq.s32.totalorder %s23, 1
      %p46 = por %p44, %p45
      %p48 = scmp.ne.s32.totalorder %s31, %s47
      %p49 = scmp.eq.s32.totalorder %s23, 0
      %p50 = por %p48, %p49
      %s52 = sadd.s32 %s51, 1
      %p55 = scmp.eq.s32.totalorder %s17, 1
      %p56 = scmp.ne.s32.totalorder %s51, %s53
      %p57 = scmp.eq.s32.totalorder %s17, 0
      %p58 = por %p56, %p57
      %p59 = scmp.ne.s32.totalorder %s51, %s53
      %p60 = scmp.eq.s32.totalorder %s22, 1
      %p61 = por %p59, %p60
      %p62 = scmp.ne.s32.totalorder %s53, %s54
      %p63 = scmp.eq.s32.totalorder %s22, 0
      %p64 = por %p62, %p63
      %p65 = scmp.ne.s32.totalorder %s53, %s54
      %p66 = scmp.eq.s32.totalorder %s23, 1
      %p67 = por %p65, %p66
      %p69 = scmp.ne.s32.totalorder %s54, %s68
      %p70 = scmp.eq.s32.totalorder %s23, 0
      %p71 = por %p69, %p70
      %s73 = sadd.s32 %s72, 1
      %p76 = scmp.eq.s32.totalorder %s17, 1
      %p77 = scmp.ne.s32.totalorder %s72, %s74
      %p78 = scmp.eq.s32.totalorder %s17, 0
      %p79 = por %p77, %p78
      %p80 = scmp.ne.s32.totalorder %s72, %s74
      %p81 = scmp.eq.s32.totalorder %s22, 1
      %p82 = por %p80, %p81
      %p83 = scmp.ne.s32.totalorder %s74, %s75
      %p84 = scmp.eq.s32.totalorder %s22, 0
      %p85 = por %p83, %p84
      %p86 = scmp.ne.s32.totalorder %s74, %s75
      %p87 = scmp.eq.s32.totalorder %s23, 1
      %p88 = por %p86, %p87
      %p90 = scmp.ne.s32.totalorder %s75, %s89
      %p91 = scmp.eq.s32.totalorder %s23, 0
      %p92 = por %p90, %p91
      %s94 = sadd.s32 %s93, 1
      %p97 = scmp.eq.s32.totalorder %s17, 1
      %p98 = scmp.ne.s32.totalorder %s93, %s95
      %p99 = scmp.eq.s32.totalorder %s17, 0
      %p100 = por %p98, %p99
      %p101 = scmp.ne.s32.totalorder %s93, %s95
      %p102 = scmp.eq.s32.totalorder %s22, 1
      %p103 = por %p101, %p102
      %p104 = scmp.ne.s32.totalorder %s95, %s96
      %p105 = scmp.eq.s32.totalorder %s22, 0
      %p106 = por %p104, %p105
      %p107 = scmp.ne.s32.totalorder %s95, %s96
      %p108 = scmp.eq.s32.totalorder %s23, 1
      %p109 = por %p107, %p108
      %p111 = scmp.ne.s32.totalorder %s96, %s110
      %p112 = scmp.eq.s32.totalorder %s23, 0
      %p113 = por %p111, %p112
      %s115 = sadd.s32 %s114, 1
      %p118 = scmp.eq.s32.totalorder %s17, 1
      %p119 = scmp.ne.s32.totalorder %s114, %s116
      %p120 = scmp.eq.s32.totalorder %s17, 0
      %p121 = por %p119, %p120
      %p122 = scmp.ne.s32.totalorder %s114, %s116
      %p123 = scmp.eq.s32.totalorder %s22, 1
      %p124 = por %p122, %p123
      %p125 = scmp.ne.s32.totalorder %s116, %s117
      %p126 = scmp.eq.s32.totalorder %s22, 0
      %p127 = por %p125, %p126
      %p128 = scmp.ne.s32.totalorder %s116, %s117
      %p129 = scmp.eq.s32.totalorder %s23, 1
      %p130 = por %p128, %p129
      %p132 = scmp.ne.s32.totalorder %s117, %s131
      %p133 = scmp.eq.s32.totalorder %s23, 0
      %p134 = por %p132, %p133
      %s136 = sadd.s32 %s135, 1
      %p139 = scmp.eq.s32.totalorder %s17, 1
      %p140 = scmp.ne.s32.totalorder %s135, %s137
      %p141 = scmp.eq.s32.totalorder %s17, 0
      %p142 = por %p140, %p141
      %p143 = scmp.ne.s32.totalorder %s135, %s137
      %p144 = scmp.eq.s32.totalorder %s22, 1
      %p145 = por %p143, %p144
      %p146 = scmp.ne.s32.totalorder %s137, %s138
      %p147 = scmp.eq.s32.totalorder %s22, 0
      %p148 = por %p146, %p147
      %p149 = scmp.ne.s32.totalorder %s137, %s138
      %p150 = scmp.eq.s32.totalorder %s23, 1
      %p151 = por %p149, %p150
      %p153 = scmp.ne.s32.totalorder %s138, %s152
      %p154 = scmp.eq.s32.totalorder %s23, 0
      %p155 = por %p153, %p154
      %s157 = sadd.s32 %s156, 1
      %p160 = scmp.eq.s32.totalorder %s17, 1
      %p161 = scmp.ne.s32.totalorder %s156, %s158
      %p162 = scmp.eq.s32.totalorder %s17, 0
      %p163 = por %p161, %p162
      %p164 = scmp.ne.s32.totalorder %s156, %s158
      %p165 = scmp.eq.s32.totalorder %s22, 1
      %p166 = por %p164, %p165
      %p167 = scmp.ne.s32.totalorder %s158, %s159
      %p168 = scmp.eq.s32.totalorder %s22, 0
      %p169 = por %p167, %p168
      %p170 = scmp.ne.s32.totalorder %s158, %s159
      %p171 = scmp.eq.s32.totalorder %s23, 1
      %p172 = por %p170, %p171
      %p174 = scmp.ne.s32.totalorder %s159, %s173
      %p175 = scmp.eq.s32.totalorder %s23, 0
      %p176 = por %p174, %p175
      %s177 = ssub.s32 %s17, %s24
      %p178 = scmp.eq.s32.totalorder %s177, 0
      %s180 = sadd.s32 %s179, 1
      %s181 = scalar_select %p178, %s179, %s180
      %p184 = pneg %p178
      %p185 = scmp.eq.s32.totalorder %s17, 1
      %p186 = por %p184, %p185
      %p187 = scmp.ne.s32.totalorder %s179, %s182
      %p188 = scmp.eq.s32.totalorder %s17, 0
      %p189 = por %p187, %p188
      %p190 = scmp.ne.s32.totalorder %s179, %s182
      %p191 = scmp.eq.s32.totalorder %s22, 1
      %p192 = por %p190, %p191
      %p193 = scmp.ne.s32.totalorder %s182, %s183
      %p194 = scmp.eq.s32.totalorder %s22, 0
      %p195 = por %p193, %p194
      %p196 = scmp.ne.s32.totalorder %s182, %s183
      %p197 = scmp.eq.s32.totalorder %s23, 1
      %p198 = por %p196, %p197
      %p200 = scmp.ne.s32.totalorder %s183, %s199
      %p201 = scmp.eq.s32.totalorder %s23, 0
      %p202 = por %p200, %p201
      %p203 = scmp.le.s32.totalorder 1, %s17
      %p204 = scmp.lt.s32.totalorder %s17, 3
      %p205 = pnand %p203, %p204
      %p206 = pneg %p205
      // Predicated region
      $region9: #{simple_net_forward.1} parent=5 // pred_check
        _
      $region10: #{simple_net_forward.1} parent=5 // pred_check_branch
        %208 = sbr.rel (%p205) target = $region12
      $region11: #{simple_net_forward.1} parent=5 // pred_region
        %s209 = ssub.s32 %s17, 1
        // Predicated region
        $region13: #{simple_net_forward.1} parent=11 // pred_check
          %p210 = pneg %p64
        $region14: #{simple_net_forward.1} parent=11 // pred_check_branch
          %212 = sbr.rel (%p210) target = $region16
        $region15: #{simple_net_forward.1} parent=11 // pred_region
          _
        $region16: #{simple_net_forward.1} parent=11 // pred_fallthru
          _
        // Predicated region
        $region17: #{simple_net_forward.1} parent=11 // pred_check
          %p213 = pneg %p85
        $region18: #{simple_net_forward.1} parent=11 // pred_check_branch
          %215 = sbr.rel (%p213) target = $region20
        $region19: #{simple_net_forward.1} parent=11 // pred_region
          _
        $region20: #{simple_net_forward.1} parent=11 // pred_fallthru
          _
        // Predicated region
        $region21: #{simple_net_forward.1} parent=11 // pred_check
          %p216 = pneg %p106
        $region22: #{simple_net_forward.1} parent=11 // pred_check_branch
          %218 = sbr.rel (%p216) target = $region24
        $region23: #{simple_net_forward.1} parent=11 // pred_region
          _
        $region24: #{simple_net_forward.1} parent=11 // pred_fallthru
          _
        // Predicated region
        $region25: #{simple_net_forward.1} parent=11 // pred_check
          %p219 = pneg %p127
        $region26: #{simple_net_forward.1} parent=11 // pred_check_branch
          %221 = sbr.rel (%p219) target = $region28
        $region27: #{simple_net_forward.1} parent=11 // pred_region
          _
        $region28: #{simple_net_forward.1} parent=11 // pred_fallthru
          _
        // Predicated region
        $region29: #{simple_net_forward.1} parent=11 // pred_check
          %p222 = pneg %p148
        $region30: #{simple_net_forward.1} parent=11 // pred_check_branch
          %224 = sbr.rel (%p222) target = $region32
        $region31: #{simple_net_forward.1} parent=11 // pred_region
          _
        $region32: #{simple_net_forward.1} parent=11 // pred_fallthru
          _
        // Predicated region
        $region33: #{simple_net_forward.1} parent=11 // pred_check
          %p225 = pneg %p169
        $region34: #{simple_net_forward.1} parent=11 // pred_check_branch
          %227 = sbr.rel (%p225) target = $region36
        $region35: #{simple_net_forward.1} parent=11 // pred_region
          _
        $region36: #{simple_net_forward.1} parent=11 // pred_fallthru
          _
      $region12: #{simple_net_forward.1} parent=5 // pred_fallthru
        _
      %p228 = scmp.lt.s32.totalorder %s17, 2
      // Predicated region
      $region37: #{simple_net_forward.1} parent=5 // pred_check
        %p229 = pneg %p228
      $region38: #{simple_net_forward.1} parent=5 // pred_check_branch
        %231 = sbr.rel (%p229) target = $region40
      $region39: #{simple_net_forward.1} parent=5 // pred_region
        // Predicated region
        $region41: #{simple_net_forward.1} parent=39 // pred_check
          %p232 = pneg %p37
        $region42: #{simple_net_forward.1} parent=39 // pred_check_branch
          %234 = sbr.rel (%p232) target = $region44
        $region43: #{simple_net_forward.1} parent=39 // pred_region
          %s235 = smul.u32 4, %s17
          %p236 = scmp.lt.s32.totalorder %s235, 7
          %s237 = scalar_select %p236, %s235, 7
          %s238 = smul.addr %s237, 4
          %s239 = scalar_lea.vmem %s0, %s238
          %s240 = smul.u32 4, %s17
        $region44: #{simple_net_forward.1} parent=39 // pred_fallthru
          _
      $region40: #{simple_net_forward.1} parent=5 // pred_fallthru
        _
      %p241 = scmp.le.s32.totalorder 1, %s17
      %p242 = scmp.lt.s32.totalorder %s17, 3
      %p243 = pnand %p241, %p242
      %p244 = pneg %p243
      // Predicated region
      $region45: #{simple_net_forward.1} parent=5 // pred_check
        _
      $region46: #{simple_net_forward.1} parent=5 // pred_check_branch
        %246 = sbr.rel (%p243) target = $region48
      $region47: #{simple_net_forward.1} parent=5 // pred_region
        %s247 = ssub.s32 %s17, 1
        %s248 = smul.u32 4, %s22
        %p249 = scmp.lt.s32.totalorder %s248, 7
        %s250 = scalar_select %p249, %s248, 7
        %s251 = smul.addr %s250, 4
        %s252 = scalar_lea.vmem %s0, %s251
        %p253 = pneg %p43
        %p254 = pneg %p40
        %p255 = pneg %p64
        %p256 = pneg %p61
        %p257 = pneg %p85
        %p258 = pneg %p82
        %p259 = pneg %p106
        %p260 = pneg %p103
        %p261 = pneg %p127
        %p262 = pneg %p124
        %p263 = pneg %p148
        %p264 = pneg %p145
        %p265 = pneg %p169
        %p266 = pneg %p166
        %p267 = pneg %p195
        %p268 = pneg %p192
        %s269 = sand.u32 %s182, 1
        %s270 = scalar_lea.sflag [#allocation4], %s269
        %s271 = sand.u32 %s182, 1
        %s272 = smul.addr %s271, 4
        %s273 = scalar_lea.vmem [#allocation3], %s272
        %s274 = smul.u32 4, %s22
        %p275 = scmp.lt.s32.totalorder %s274, 7
        %s276 = scalar_select %p275, %s274, 7
        %s277 = smul.addr %s276, 4
        %s278 = scalar_lea.vmem %s0, %s277
        %s279 = smul.u32 4, %s22
        %s280 = smul.u32 4, %s22
        %v281 = vld [vmem:[%s278] sm:$0x77]
        %v282 = vld [vmem:[%s278 + $0x8] sm:$0x77]
        %v283 = vld [vmem:[%s1] sm:$0xff]
        %v284 = vld [vmem:[%s1 + $0x8] sm:$0xff]
        %v285 = vld [vmem:[%s1 + $0x10] sm:$0xff]
        %v286 = vld [vmem:[%s1 + $0x18] sm:$0xff]
        %v287 = vld [vmem:[%s1 + $0x20] sm:$0xff]
        %v288 = vld [vmem:[%s1 + $0x28] sm:$0xff]
        %v289 = vld [vmem:[%s1 + $0x30] sm:$0xff]
        %v290 = vld [vmem:[%s1 + $0x38] sm:$0xff]
        %v291 = vld [vmem:[%s2] sm:$0xff]
        %v292 = vld [vmem:[%s2 + $0x8] sm:$0xff]
        %v293 = vld [vmem:[%s2 + $0x10] sm:$0xff]
        %v294 = vld [vmem:[%s2 + $0x18] sm:$0xff]
        %v295 = vld [vmem:[%s2 + $0x20] sm:$0xff]
        %v296 = vld [vmem:[%s2 + $0x28] sm:$0xff]
        %v297 = vld [vmem:[%s2 + $0x30] sm:$0xff]
        %v298 = vld [vmem:[%s2 + $0x38] sm:$0xff]
        %300 = vset.pattern.permute.xlu0 0
        %301 = vperm.xlu0 %300, %v291
        %v302 = vpop.permute.xlu0 %301
        %305 = vset.pattern.permute.xlu0 0
        %306 = vperm.xlu0 %305, %v292
        %v307 = vpop.permute.xlu0 %306
        %310 = vset.pattern.permute.xlu0 0
        %311 = vperm.xlu0 %310, %v293
        %v312 = vpop.permute.xlu0 %311
        %315 = vset.pattern.permute.xlu0 0
        %316 = vperm.xlu0 %315, %v294
        %v317 = vpop.permute.xlu0 %316
        %320 = vset.pattern.permute.xlu0 0
        %321 = vperm.xlu0 %320, %v295
        %v322 = vpop.permute.xlu0 %321
        %325 = vset.pattern.permute.xlu0 0
        %326 = vperm.xlu0 %325, %v296
        %v327 = vpop.permute.xlu0 %326
        %330 = vset.pattern.permute.xlu0 0
        %331 = vperm.xlu0 %330, %v297
        %v332 = vpop.permute.xlu0 %331
        %335 = vset.pattern.permute.xlu0 0
        %336 = vperm.xlu0 %335, %v298
        %v337 = vpop.permute.xlu0 %336
        %v341 = vcombine.high %v281, %v281
        %v342 = vcombine.high %v282, %v282
        %vm343 = vcmask 23552
        %v345 = vsel %vm343, %v283, 0
        %v348 = vsel %vm343, %v284, 0
        %v351 = vsel %vm343, %v285, 0
        %v354 = vsel %vm343, %v286, 0
        %v357 = vsel %vm343, %v287, 0
        %v360 = vsel %vm343, %v288, 0
        %v363 = vsel %vm343, %v289, 0
        %v366 = vsel %vm343, %v290, 0
        %vm368 = vcmask 1042432
        %v369 = vsel %vm368, %v281, 0
        %v371 = vsel %vm368, %v341, 0
        %v373 = vsel %vm368, %v282, 0
        %v375 = vsel %vm368, %v342, 0
        %377 = vmatprep.subr.mxu0 %v371
        %378 = vmatpush1.msra.mxu0 %v369
        %379 = vmatprep.subr.mxu0 0.0
        %380 = vmatpush1.msra.mxu0 0.0
        %381 = vmatprep.subr.mxu0 0.0
        %382 = vmatpush1.msra.mxu0 0.0
        %383 = vmatprep.subr.mxu0 0.0
        %384 = vmatpush1.msra.mxu0 0.0
        %385 = vmatprep.subr.mxu0 0.0
        %386 = vmatpush1.msra.mxu0 0.0
        %387 = vmatprep.subr.mxu0 0.0
        %388 = vmatpush1.msra.mxu0 0.0
        %389 = vmatprep.subr.mxu0 0.0
        %390 = vmatpush1.msra.mxu0 0.0
        %391 = vmatprep.subr.mxu0 0.0
        %392 = vmatpush1.msra.mxu0 0.0
        %393 = vmatprep.subr.mxu0 0.0
        %394 = vmatpush1.msra.mxu0 0.0
        %395 = vmatprep.subr.mxu0 0.0
        %396 = vmatpush1.msra.mxu0 0.0
        %397 = vmatprep.subr.mxu0 0.0
        %398 = vmatpush1.msra.mxu0 0.0
        %399 = vmatprep.subr.mxu0 0.0
        %400 = vmatpush1.msra.mxu0 0.0
        %401 = vmatprep.subr.mxu0 0.0
        %402 = vmatpush1.msra.mxu0 0.0
        %403 = vmatprep.subr.mxu0 0.0
        %404 = vmatpush1.msra.mxu0 0.0
        %405 = vmatprep.subr.mxu0 0.0
        %406 = vmatpush1.msra.mxu0 0.0
        %407 = vmatprep.subr.mxu0 0.0
        %408 = vmatpush1.msra.mxu0 0.0
        %409 = vmatprep.subr.mxu0 0.0
        %410 = vmatpush1.msra.mxu0 0.0
        %411 = vmatprep.subr.mxu0 0.0
        %412 = vmatpush1.msra.mxu0 0.0
        %413 = vmatprep.subr.mxu0 0.0
        %414 = vmatpush1.msra.mxu0 0.0
        %415 = vmatprep.subr.mxu0 0.0
        %416 = vmatpush1.msra.mxu0 0.0
        %417 = vmatprep.subr.mxu0 0.0
        %418 = vmatpush1.msra.mxu0 0.0
        %419 = vmatprep.subr.mxu0 0.0
        %420 = vmatpush1.msra.mxu0 0.0
        %421 = vmatprep.subr.mxu0 0.0
        %422 = vmatpush1.msra.mxu0 0.0
        %423 = vmatprep.subr.mxu0 0.0
        %424 = vmatpush1.msra.mxu0 0.0
        %425 = vmatprep.subr.mxu0 0.0
        %426 = vmatpush1.msra.mxu0 0.0
        %427 = vmatprep.subr.mxu0 0.0
        %428 = vmatpush1.msra.mxu0 0.0
        %429 = vmatprep.subr.mxu0 0.0
        %430 = vmatpush1.msra.mxu0 0.0
        %431 = vmatprep.subr.mxu0 0.0
        %432 = vmatpush1.msra.mxu0 0.0
        %433 = vmatprep.subr.mxu0 0.0
        %434 = vmatpush1.msra.mxu0 0.0
        %435 = vmatprep.subr.mxu0 0.0
        %436 = vmatpush1.msra.mxu0 0.0
        %437 = vmatprep.subr.mxu0 0.0
        %438 = vmatpush1.msra.mxu0 0.0
        %439 = vmatprep.subr.mxu0 0.0
        %440 = vmatpush1.msra.mxu0 0.0
        %441 = vmatprep.mubr.f32.mxu0 0.0
        %442 = vmatmul.mubr.f32.gmra.mrb[0].mxu0 %v345
        %v443 = vpop.f32.mrb[0].mxu0
        %v444 = vadd.f32 %v302, %v443
        %v445 = vpop.f32.mrb[0].mxu0
        %v446 = vadd.f32 %v302, %v445
        %447 = vmatprep.mubr.f32.mxu0 0.0
        %448 = vmatmul.mubr.f32.gmra.mrb[0].mxu0 %v348
        %v449 = vpop.f32.mrb[0].mxu0
        %v450 = vadd.f32 %v307, %v449
        %v451 = vpop.f32.mrb[0].mxu0
        %v452 = vadd.f32 %v307, %v451
        %453 = vmatprep.mubr.f32.mxu0 0.0
        %454 = vmatmul.mubr.f32.gmra.mrb[0].mxu0 %v351
        %v455 = vpop.f32.mrb[0].mxu0
        %v456 = vadd.f32 %v312, %v455
        %v457 = vpop.f32.mrb[0].mxu0
        %v458 = vadd.f32 %v312, %v457
        %459 = vmatprep.mubr.f32.mxu0 0.0
        %460 = vmatmul.mubr.f32.gmra.mrb[0].mxu0 %v354
        %v461 = vpop.f32.mrb[0].mxu0
        %v462 = vadd.f32 %v317, %v461
        %v463 = vpop.f32.mrb[0].mxu0
        %v464 = vadd.f32 %v317, %v463
        %465 = vmatprep.mubr.f32.mxu0 0.0
        %466 = vmatmul.mubr.f32.gmra.mrb[0].mxu0 %v357
        %v467 = vpop.f32.mrb[0].mxu0
        %v468 = vadd.f32 %v322, %v467
        %v469 = vpop.f32.mrb[0].mxu0
        %v470 = vadd.f32 %v322, %v469
        %471 = vmatprep.mubr.f32.mxu0 0.0
        %472 = vmatmul.mubr.f32.gmra.mrb[0].mxu0 %v360
        %v473 = vpop.f32.mrb[0].mxu0
        %v474 = vadd.f32 %v327, %v473
        %v475 = vpop.f32.mrb[0].mxu0
        %v476 = vadd.f32 %v327, %v475
        %477 = vmatprep.mubr.f32.mxu0 0.0
        %478 = vmatmul.mubr.f32.gmra.mrb[0].mxu0 %v363
        %v479 = vpop.f32.mrb[0].mxu0
        %v480 = vadd.f32 %v332, %v479
        %v481 = vpop.f32.mrb[0].mxu0
        %v482 = vadd.f32 %v332, %v481
        %483 = vmatprep.mubr.f32.mxu0 0.0
        %484 = vmatmul.mubr.f32.gmra.mrb[0].mxu0 %v366
        %v485 = vpop.f32.mrb[0].mxu0
        %v486 = vadd.f32 %v337, %v485
        %v487 = vpop.f32.mrb[0].mxu0
        %v488 = vadd.f32 %v337, %v487
        %489 = vdwg.mxu0
        %490 = vmatprep.subr.mxu0 %v375
        %491 = vmatpush1.msra.mxu0 %v373
        %492 = vmatprep.subr.mxu0 0.0
        %493 = vmatpush1.msra.mxu0 0.0
        %494 = vmatprep.subr.mxu0 0.0
        %495 = vmatpush1.msra.mxu0 0.0
        %496 = vmatprep.subr.mxu0 0.0
        %497 = vmatpush1.msra.mxu0 0.0
        %498 = vmatprep.subr.mxu0 0.0
        %499 = vmatpush1.msra.mxu0 0.0
        %500 = vmatprep.subr.mxu0 0.0
        %501 = vmatpush1.msra.mxu0 0.0
        %502 = vmatprep.subr.mxu0 0.0
        %503 = vmatpush1.msra.mxu0 0.0
        %504 = vmatprep.subr.mxu0 0.0
        %505 = vmatpush1.msra.mxu0 0.0
        %506 = vmatprep.subr.mxu0 0.0
        %507 = vmatpush1.msra.mxu0 0.0
        %508 = vmatprep.subr.mxu0 0.0
        %509 = vmatpush1.msra.mxu0 0.0
        %510 = vmatprep.subr.mxu0 0.0
        %511 = vmatpush1.msra.mxu0 0.0
        %512 = vmatprep.subr.mxu0 0.0
        %513 = vmatpush1.msra.mxu0 0.0
        %514 = vmatprep.subr.mxu0 0.0
        %515 = vmatpush1.msra.mxu0 0.0
        %516 = vmatprep.subr.mxu0 0.0
        %517 = vmatpush1.msra.mxu0 0.0
        %518 = vmatprep.subr.mxu0 0.0
        %519 = vmatpush1.msra.mxu0 0.0
        %520 = vmatprep.subr.mxu0 0.0
        %521 = vmatpush1.msra.mxu0 0.0
        %522 = vmatprep.subr.mxu0 0.0
        %523 = vmatpush1.msra.mxu0 0.0
        %524 = vmatprep.subr.mxu0 0.0
        %525 = vmatpush1.msra.mxu0 0.0
        %526 = vmatprep.subr.mxu0 0.0
        %527 = vmatpush1.msra.mxu0 0.0
        %528 = vmatprep.subr.mxu0 0.0
        %529 = vmatpush1.msra.mxu0 0.0
        %530 = vmatprep.subr.mxu0 0.0
        %531 = vmatpush1.msra.mxu0 0.0
        %532 = vmatprep.subr.mxu0 0.0
        %533 = vmatpush1.msra.mxu0 0.0
        %534 = vmatprep.subr.mxu0 0.0
        %535 = vmatpush1.msra.mxu0 0.0
        %536 = vmatprep.subr.mxu0 0.0
        %537 = vmatpush1.msra.mxu0 0.0
        %538 = vmatprep.subr.mxu0 0.0
        %539 = vmatpush1.msra.mxu0 0.0
        %540 = vmatprep.subr.mxu0 0.0
        %541 = vmatpush1.msra.mxu0 0.0
        %542 = vmatprep.subr.mxu0 0.0
        %543 = vmatpush1.msra.mxu0 0.0
        %544 = vmatprep.subr.mxu0 0.0
        %545 = vmatpush1.msra.mxu0 0.0
        %546 = vmatprep.subr.mxu0 0.0
        %547 = vmatpush1.msra.mxu0 0.0
        %548 = vmatprep.subr.mxu0 0.0
        %549 = vmatpush1.msra.mxu0 0.0
        %550 = vmatprep.subr.mxu0 0.0
        %551 = vmatpush1.msra.mxu0 0.0
        %552 = vmatprep.subr.mxu0 0.0
        %553 = vmatpush1.msra.mxu0 0.0
        %554 = vmatprep.mubr.f32.mxu0 0.0
        %555 = vmatmul.mubr.f32.gmra.mrb[0].mxu0 %v345
        %v556 = vpop.f32.mrb[0].mxu0
        %v557 = vadd.f32 %v302, %v556
        %v558 = vpop.f32.mrb[0].mxu0
        %v559 = vadd.f32 %v302, %v558
        %560 = vmatprep.mubr.f32.mxu0 0.0
        %561 = vmatmul.mubr.f32.gmra.mrb[0].mxu0 %v348
        %v562 = vpop.f32.mrb[0].mxu0
        %v563 = vadd.f32 %v307, %v562
        %v564 = vpop.f32.mrb[0].mxu0
        %v565 = vadd.f32 %v307, %v564
        %566 = vmatprep.mubr.f32.mxu0 0.0
        %567 = vmatmul.mubr.f32.gmra.mrb[0].mxu0 %v351
        %v568 = vpop.f32.mrb[0].mxu0
        %v569 = vadd.f32 %v312, %v568
        %v570 = vpop.f32.mrb[0].mxu0
        %v571 = vadd.f32 %v312, %v570
        %572 = vmatprep.mubr.f32.mxu0 0.0
        %573 = vmatmul.mubr.f32.gmra.mrb[0].mxu0 %v354
        %v574 = vpop.f32.mrb[0].mxu0
        %v575 = vadd.f32 %v317, %v574
        %v576 = vpop.f32.mrb[0].mxu0
        %v577 = vadd.f32 %v317, %v576
        %578 = vmatprep.mubr.f32.mxu0 0.0
        %579 = vmatmul.mubr.f32.gmra.mrb[0].mxu0 %v357
        %v580 = vpop.f32.mrb[0].mxu0
        %v581 = vadd.f32 %v322, %v580
        %v582 = vpop.f32.mrb[0].mxu0
        %v583 = vadd.f32 %v322, %v582
        %584 = vmatprep.mubr.f32.mxu0 0.0
        %585 = vmatmul.mubr.f32.gmra.mrb[0].mxu0 %v360
        %v586 = vpop.f32.mrb[0].mxu0
        %v587 = vadd.f32 %v327, %v586
        %v588 = vpop.f32.mrb[0].mxu0
        %v589 = vadd.f32 %v327, %v588
        %590 = vmatprep.mubr.f32.mxu0 0.0
        %591 = vmatmul.mubr.f32.gmra.mrb[0].mxu0 %v363
        %v592 = vpop.f32.mrb[0].mxu0
        %v593 = vadd.f32 %v332, %v592
        %v594 = vpop.f32.mrb[0].mxu0
        %v595 = vadd.f32 %v332, %v594
        %596 = vmatprep.mubr.f32.mxu0 0.0
        %597 = vmatmul.mubr.f32.gmra.mrb[0].mxu0 %v366
        %v598 = vpop.f32.mrb[0].mxu0
        %v599 = vadd.f32 %v337, %v598
        %v600 = vpop.f32.mrb[0].mxu0
        %v601 = vadd.f32 %v337, %v600
        %602 = vdwg.mxu0
        %v603 = vmax.f32 %v444, 0.0
        %v604 = vmax.f32 %v446, 0.0
        %v605 = vmax.f32 %v557, 0.0
        %v606 = vmax.f32 %v559, 0.0
        %v607 = vmax.f32 %v450, 0.0
        %v608 = vmax.f32 %v452, 0.0
        %v609 = vmax.f32 %v563, 0.0
        %v610 = vmax.f32 %v565, 0.0
        %v611 = vmax.f32 %v456, 0.0
        %v612 = vmax.f32 %v458, 0.0
        %v613 = vmax.f32 %v569, 0.0
        %v614 = vmax.f32 %v571, 0.0
        %v615 = vmax.f32 %v462, 0.0
        %v616 = vmax.f32 %v464, 0.0
        %v617 = vmax.f32 %v575, 0.0
        %v618 = vmax.f32 %v577, 0.0
        %v619 = vmax.f32 %v468, 0.0
        %v620 = vmax.f32 %v470, 0.0
        %v621 = vmax.f32 %v581, 0.0
        %v622 = vmax.f32 %v583, 0.0
        %v623 = vmax.f32 %v474, 0.0
        %v624 = vmax.f32 %v476, 0.0
        %v625 = vmax.f32 %v587, 0.0
        %v626 = vmax.f32 %v589, 0.0
        %v627 = vmax.f32 %v480, 0.0
        %v628 = vmax.f32 %v482, 0.0
        %v629 = vmax.f32 %v593, 0.0
        %v630 = vmax.f32 %v595, 0.0
        %v631 = vmax.f32 %v486, 0.0
        %v632 = vmax.f32 %v488, 0.0
        %v633 = vmax.f32 %v599, 0.0
        %v634 = vmax.f32 %v601, 0.0
        %v635 = vld [vmem:[%s3] sm:$0xff]
        %v636 = vld [vmem:[%s3 + $0x8] sm:$0xff]
        %v637 = vld [vmem:[%s3 + $0x10] sm:$0xff]
        %v638 = vld [vmem:[%s3 + $0x18] sm:$0xff]
        %v639 = vld [vmem:[%s3 + $0x20] sm:$0xff]
        %v640 = vld [vmem:[%s3 + $0x28] sm:$0xff]
        %v641 = vld [vmem:[%s3 + $0x30] sm:$0xff]
        %v642 = vld [vmem:[%s3 + $0x38] sm:$0xff]
        %v643 = vld [vmem:[%s4] sm:$0xff]
        %v644 = vld [vmem:[%s4 + $0x8] sm:$0xff]
        %v645 = vld [vmem:[%s4 + $0x10] sm:$0xff]
        %v646 = vld [vmem:[%s4 + $0x18] sm:$0xff]
        %v647 = vld [vmem:[%s4 + $0x20] sm:$0xff]
        %v648 = vld [vmem:[%s4 + $0x28] sm:$0xff]
        %v649 = vld [vmem:[%s4 + $0x30] sm:$0xff]
        %v650 = vld [vmem:[%s4 + $0x38] sm:$0xff]
        %652 = vset.pattern.permute.xlu0 0
        %653 = vperm.xlu0 %652, %v643
        %v654 = vpop.permute.xlu0 %653
        %657 = vset.pattern.permute.xlu0 0
        %658 = vperm.xlu0 %657, %v644
        %v659 = vpop.permute.xlu0 %658
        %662 = vset.pattern.permute.xlu0 0
        %663 = vperm.xlu0 %662, %v645
        %v664 = vpop.permute.xlu0 %663
        %667 = vset.pattern.permute.xlu0 0
        %668 = vperm.xlu0 %667, %v646
        %v669 = vpop.permute.xlu0 %668
        %672 = vset.pattern.permute.xlu0 0
        %673 = vperm.xlu0 %672, %v647
        %v674 = vpop.permute.xlu0 %673
        %677 = vset.pattern.permute.xlu0 0
        %678 = vperm.xlu0 %677, %v648
        %v679 = vpop.permute.xlu0 %678
        %682 = vset.pattern.permute.xlu0 0
        %683 = vperm.xlu0 %682, %v649
        %v684 = vpop.permute.xlu0 %683
        %687 = vset.pattern.permute.xlu0 0
        %688 = vperm.xlu0 %687, %v650
        %v689 = vpop.permute.xlu0 %688
        %vm691 = vcmask 523264
        %v693 = vsel %vm691, %v635, 0
        %v696 = vsel %vm691, %v636, 0
        %v699 = vsel %vm691, %v637, 0
        %v702 = vsel %vm691, %v638, 0
        %v705 = vsel %vm691, %v639, 0
        %v708 = vsel %vm691, %v640, 0
        %v711 = vsel %vm691, %v641, 0
        %v714 = vsel %vm691, %v642, 0
        %716 = vmatprep.subr.mxu0 %v604
        %717 = vmatpush1.msra.mxu0 %v603
        %718 = vmatprep.subr.mxu0 %v608
        %719 = vmatpush1.msra.mxu0 %v607
        %720 = vmatprep.subr.mxu0 %v612
        %721 = vmatpush1.msra.mxu0 %v611
        %722 = vmatprep.subr.mxu0 %v616
        %723 = vmatpush1.msra.mxu0 %v615
        %724 = vmatprep.subr.mxu0 %v620
        %725 = vmatpush1.msra.mxu0 %v619
        %726 = vmatprep.subr.mxu0 %v624
        %727 = vmatpush1.msra.mxu0 %v623
        %728 = vmatprep.subr.mxu0 %v628
        %729 = vmatpush1.msra.mxu0 %v627
        %730 = vmatprep.subr.mxu0 %v632
        %731 = vmatpush1.msra.mxu0 %v631
        %732 = vmatprep.subr.mxu0 0.0
        %733 = vmatpush1.msra.mxu0 0.0
        %734 = vmatprep.subr.mxu0 0.0
        %735 = vmatpush1.msra.mxu0 0.0
        %736 = vmatprep.subr.mxu0 0.0
        %737 = vmatpush1.msra.mxu0 0.0
        %738 = vmatprep.subr.mxu0 0.0
        %739 = vmatpush1.msra.mxu0 0.0
        %740 = vmatprep.subr.mxu0 0.0
        %741 = vmatpush1.msra.mxu0 0.0
        %742 = vmatprep.subr.mxu0 0.0
        %743 = vmatpush1.msra.mxu0 0.0
        %744 = vmatprep.subr.mxu0 0.0
        %745 = vmatpush1.msra.mxu0 0.0
        %746 = vmatprep.subr.mxu0 0.0
        %747 = vmatpush1.msra.mxu0 0.0
        %748 = vmatprep.subr.mxu0 0.0
        %749 = vmatpush1.msra.mxu0 0.0
        %750 = vmatprep.subr.mxu0 0.0
        %751 = vmatpush1.msra.mxu0 0.0
        %752 = vmatprep.subr.mxu0 0.0
        %753 = vmatpush1.msra.mxu0 0.0
        %754 = vmatprep.subr.mxu0 0.0
        %755 = vmatpush1.msra.mxu0 0.0
        %756 = vmatprep.subr.mxu0 0.0
        %757 = vmatpush1.msra.mxu0 0.0
        %758 = vmatprep.subr.mxu0 0.0
        %759 = vmatpush1.msra.mxu0 0.0
        %760 = vmatprep.subr.mxu0 0.0
        %761 = vmatpush1.msra.mxu0 0.0
        %762 = vmatprep.subr.mxu0 0.0
        %763 = vmatpush1.msra.mxu0 0.0
        %764 = vmatprep.subr.mxu0 0.0
        %765 = vmatpush1.msra.mxu0 0.0
        %766 = vmatprep.subr.mxu0 0.0
        %767 = vmatpush1.msra.mxu0 0.0
        %768 = vmatprep.subr.mxu0 0.0
        %769 = vmatpush1.msra.mxu0 0.0
        %770 = vmatprep.subr.mxu0 0.0
        %771 = vmatpush1.msra.mxu0 0.0
        %772 = vmatprep.subr.mxu0 0.0
        %773 = vmatpush1.msra.mxu0 0.0
        %774 = vmatprep.subr.mxu0 0.0
        %775 = vmatpush1.msra.mxu0 0.0
        %776 = vmatprep.subr.mxu0 0.0
        %777 = vmatpush1.msra.mxu0 0.0
        %778 = vmatprep.subr.mxu0 0.0
        %779 = vmatpush1.msra.mxu0 0.0
        %780 = vmatprep.mubr.f32.mxu0 0.0
        %781 = vmatmul.mubr.f32.gmra.mrb[0].mxu0 %v693
        %v782 = vpop.f32.mrb[0].mxu0
        %v783 = vadd.f32 %v654, %v782
        %v784 = vpop.f32.mrb[0].mxu0
        %v785 = vadd.f32 %v654, %v784
        %786 = vmatprep.mubr.f32.mxu0 0.0
        %787 = vmatmul.mubr.f32.gmra.mrb[0].mxu0 %v696
        %v788 = vpop.f32.mrb[0].mxu0
        %v789 = vadd.f32 %v659, %v788
        %v790 = vpop.f32.mrb[0].mxu0
        %v791 = vadd.f32 %v659, %v790
        %792 = vmatprep.mubr.f32.mxu0 0.0
        %793 = vmatmul.mubr.f32.gmra.mrb[0].mxu0 %v699
        %v794 = vpop.f32.mrb[0].mxu0
        %v795 = vadd.f32 %v664, %v794
        %v796 = vpop.f32.mrb[0].mxu0
        %v797 = vadd.f32 %v664, %v796
        %798 = vmatprep.mubr.f32.mxu0 0.0
        %799 = vmatmul.mubr.f32.gmra.mrb[0].mxu0 %v702
        %v800 = vpop.f32.mrb[0].mxu0
        %v801 = vadd.f32 %v669, %v800
        %v802 = vpop.f32.mrb[0].mxu0
        %v803 = vadd.f32 %v669, %v802
        %804 = vmatprep.mubr.f32.mxu0 0.0
        %805 = vmatmul.mubr.f32.gmra.mrb[0].mxu0 %v705
        %v806 = vpop.f32.mrb[0].mxu0
        %v807 = vadd.f32 %v674, %v806
        %v808 = vpop.f32.mrb[0].mxu0
        %v809 = vadd.f32 %v674, %v808
        %810 = vmatprep.mubr.f32.mxu0 0.0
        %811 = vmatmul.mubr.f32.gmra.mrb[0].mxu0 %v708
        %v812 = vpop.f32.mrb[0].mxu0
        %v813 = vadd.f32 %v679, %v812
        %v814 = vpop.f32.mrb[0].mxu0
        %v815 = vadd.f32 %v679, %v814
        %816 = vmatprep.mubr.f32.mxu0 0.0
        %817 = vmatmul.mubr.f32.gmra.mrb[0].mxu0 %v711
        %v818 = vpop.f32.mrb[0].mxu0
        %v819 = vadd.f32 %v684, %v818
        %v820 = vpop.f32.mrb[0].mxu0
        %v821 = vadd.f32 %v684, %v820
        %822 = vmatprep.mubr.f32.mxu0 0.0
        %823 = vmatmul.mubr.f32.gmra.mrb[0].mxu0 %v714
        %v824 = vpop.f32.mrb[0].mxu0
        %v825 = vadd.f32 %v689, %v824
        %v826 = vpop.f32.mrb[0].mxu0
        %v827 = vadd.f32 %v689, %v826
        %828 = vdwg.mxu0
        %829 = vmatprep.subr.mxu0 %v606
        %830 = vmatpush1.msra.mxu0 %v605
        %831 = vmatprep.subr.mxu0 %v610
        %832 = vmatpush1.msra.mxu0 %v609
        %833 = vmatprep.subr.mxu0 %v614
        %834 = vmatpush1.msra.mxu0 %v613
        %835 = vmatprep.subr.mxu0 %v618
        %836 = vmatpush1.msra.mxu0 %v617
        %837 = vmatprep.subr.mxu0 %v622
        %838 = vmatpush1.msra.mxu0 %v621
        %839 = vmatprep.subr.mxu0 %v626
        %840 = vmatpush1.msra.mxu0 %v625
        %841 = vmatprep.subr.mxu0 %v630
        %842 = vmatpush1.msra.mxu0 %v629
        %843 = vmatprep.subr.mxu0 %v634
        %844 = vmatpush1.msra.mxu0 %v633
        %845 = vmatprep.subr.mxu0 0.0
        %846 = vmatpush1.msra.mxu0 0.0
        %847 = vmatprep.subr.mxu0 0.0
        %848 = vmatpush1.msra.mxu0 0.0
        %849 = vmatprep.subr.mxu0 0.0
        %850 = vmatpush1.msra.mxu0 0.0
        %851 = vmatprep.subr.mxu0 0.0
        %852 = vmatpush1.msra.mxu0 0.0
        %853 = vmatprep.subr.mxu0 0.0
        %854 = vmatpush1.msra.mxu0 0.0
        %855 = vmatprep.subr.mxu0 0.0
        %856 = vmatpush1.msra.mxu0 0.0
        %857 = vmatprep.subr.mxu0 0.0
        %858 = vmatpush1.msra.mxu0 0.0
        %859 = vmatprep.subr.mxu0 0.0
        %860 = vmatpush1.msra.mxu0 0.0
        %861 = vmatprep.subr.mxu0 0.0
        %862 = vmatpush1.msra.mxu0 0.0
        %863 = vmatprep.subr.mxu0 0.0
        %864 = vmatpush1.msra.mxu0 0.0
        %865 = vmatprep.subr.mxu0 0.0
        %866 = vmatpush1.msra.mxu0 0.0
        %867 = vmatprep.subr.mxu0 0.0
        %868 = vmatpush1.msra.mxu0 0.0
        %869 = vmatprep.subr.mxu0 0.0
        %870 = vmatpush1.msra.mxu0 0.0
        %871 = vmatprep.subr.mxu0 0.0
        %872 = vmatpush1.msra.mxu0 0.0
        %873 = vmatprep.subr.mxu0 0.0
        %874 = vmatpush1.msra.mxu0 0.0
        %875 = vmatprep.subr.mxu0 0.0
        %876 = vmatpush1.msra.mxu0 0.0
        %877 = vmatprep.subr.mxu0 0.0
        %878 = vmatpush1.msra.mxu0 0.0
        %879 = vmatprep.subr.mxu0 0.0
        %880 = vmatpush1.msra.mxu0 0.0
        %881 = vmatprep.subr.mxu0 0.0
        %882 = vmatpush1.msra.mxu0 0.0
        %883 = vmatprep.subr.mxu0 0.0
        %884 = vmatpush1.msra.mxu0 0.0
        %885 = vmatprep.subr.mxu0 0.0
        %886 = vmatpush1.msra.mxu0 0.0
        %887 = vmatprep.subr.mxu0 0.0
        %888 = vmatpush1.msra.mxu0 0.0
        %889 = vmatprep.subr.mxu0 0.0
        %890 = vmatpush1.msra.mxu0 0.0
        %891 = vmatprep.subr.mxu0 0.0
        %892 = vmatpush1.msra.mxu0 0.0
        %893 = vmatprep.mubr.f32.mxu0 0.0
        %894 = vmatmul.mubr.f32.gmra.mrb[0].mxu0 %v693
        %v895 = vpop.f32.mrb[0].mxu0
        %v896 = vadd.f32 %v654, %v895
        %v897 = vpop.f32.mrb[0].mxu0
        %v898 = vadd.f32 %v654, %v897
        %899 = vmatprep.mubr.f32.mxu0 0.0
        %900 = vmatmul.mubr.f32.gmra.mrb[0].mxu0 %v696
        %v901 = vpop.f32.mrb[0].mxu0
        %v902 = vadd.f32 %v659, %v901
        %v903 = vpop.f32.mrb[0].mxu0
        %v904 = vadd.f32 %v659, %v903
        %905 = vmatprep.mubr.f32.mxu0 0.0
        %906 = vmatmul.mubr.f32.gmra.mrb[0].mxu0 %v699
        %v907 = vpop.f32.mrb[0].mxu0
        %v908 = vadd.f32 %v664, %v907
        %v909 = vpop.f32.mrb[0].mxu0
        %v910 = vadd.f32 %v664, %v909
        %911 = vmatprep.mubr.f32.mxu0 0.0
        %912 = vmatmul.mubr.f32.gmra.mrb[0].mxu0 %v702
        %v913 = vpop.f32.mrb[0].mxu0
        %v914 = vadd.f32 %v669, %v913
        %v915 = vpop.f32.mrb[0].mxu0
        %v916 = vadd.f32 %v669, %v915
        %917 = vmatprep.mubr.f32.mxu0 0.0
        %918 = vmatmul.mubr.f32.gmra.mrb[0].mxu0 %v705
        %v919 = vpop.f32.mrb[0].mxu0
        %v920 = vadd.f32 %v674, %v919
        %v921 = vpop.f32.mrb[0].mxu0
        %v922 = vadd.f32 %v674, %v921
        %923 = vmatprep.mubr.f32.mxu0 0.0
        %924 = vmatmul.mubr.f32.gmra.mrb[0].mxu0 %v708
        %v925 = vpop.f32.mrb[0].mxu0
        %v926 = vadd.f32 %v679, %v925
        %v927 = vpop.f32.mrb[0].mxu0
        %v928 = vadd.f32 %v679, %v927
        %929 = vmatprep.mubr.f32.mxu0 0.0
        %930 = vmatmul.mubr.f32.gmra.mrb[0].mxu0 %v711
        %v931 = vpop.f32.mrb[0].mxu0
        %v932 = vadd.f32 %v684, %v931
        %v933 = vpop.f32.mrb[0].mxu0
        %v934 = vadd.f32 %v684, %v933
        %935 = vmatprep.mubr.f32.mxu0 0.0
        %936 = vmatmul.mubr.f32.gmra.mrb[0].mxu0 %v714
        %v937 = vpop.f32.mrb[0].mxu0
        %v938 = vadd.f32 %v689, %v937
        %v939 = vpop.f32.mrb[0].mxu0
        %v940 = vadd.f32 %v689, %v939
        %941 = vdwg.mxu0
        %v942 = vmax.f32 %v783, 0.0
        %v943 = vmax.f32 %v785, 0.0
        %v944 = vmax.f32 %v896, 0.0
        %v945 = vmax.f32 %v898, 0.0
        %v946 = vmax.f32 %v789, 0.0
        %v947 = vmax.f32 %v791, 0.0
        %v948 = vmax.f32 %v902, 0.0
        %v949 = vmax.f32 %v904, 0.0
        %v950 = vmax.f32 %v795, 0.0
        %v951 = vmax.f32 %v797, 0.0
        %v952 = vmax.f32 %v908, 0.0
        %v953 = vmax.f32 %v910, 0.0
        %v954 = vmax.f32 %v801, 0.0
        %v955 = vmax.f32 %v803, 0.0
        %v956 = vmax.f32 %v914, 0.0
        %v957 = vmax.f32 %v916, 0.0
        %v958 = vmax.f32 %v807, 0.0
        %v959 = vmax.f32 %v809, 0.0
        %v960 = vmax.f32 %v920, 0.0
        %v961 = vmax.f32 %v922, 0.0
        %v962 = vmax.f32 %v813, 0.0
        %v963 = vmax.f32 %v815, 0.0
        %v964 = vmax.f32 %v926, 0.0
        %v965 = vmax.f32 %v928, 0.0
        %v966 = vmax.f32 %v819, 0.0
        %v967 = vmax.f32 %v821, 0.0
        %v968 = vmax.f32 %v932, 0.0
        %v969 = vmax.f32 %v934, 0.0
        %v970 = vmax.f32 %v825, 0.0
        %v971 = vmax.f32 %v827, 0.0
        %v972 = vmax.f32 %v938, 0.0
        %v973 = vmax.f32 %v940, 0.0
        %v974 = vld [vmem:[%s5] sm:$0x1]
        %s975 = sld [smem:[#allocation2]]
        %v976 = vstv %s975
        %v978 = vsel %vm691, %v974, 0
        %980 = vmatprep.subr.mxu0 %v943
        %981 = vmatpush1.msra.mxu0 %v942
        %982 = vmatprep.subr.mxu0 %v947
        %983 = vmatpush1.msra.mxu0 %v946
        %984 = vmatprep.subr.mxu0 %v951
        %985 = vmatpush1.msra.mxu0 %v950
        %986 = vmatprep.subr.mxu0 %v955
        %987 = vmatpush1.msra.mxu0 %v954
        %988 = vmatprep.subr.mxu0 %v959
        %989 = vmatpush1.msra.mxu0 %v958
        %990 = vmatprep.subr.mxu0 %v963
        %991 = vmatpush1.msra.mxu0 %v962
        %992 = vmatprep.subr.mxu0 %v967
        %993 = vmatpush1.msra.mxu0 %v966
        %994 = vmatprep.subr.mxu0 %v971
        %995 = vmatpush1.msra.mxu0 %v970
        %996 = vmatprep.subr.mxu0 0.0
        %997 = vmatpush1.msra.mxu0 0.0
        %998 = vmatprep.subr.mxu0 0.0
        %999 = vmatpush1.msra.mxu0 0.0
        %1000 = vmatprep.subr.mxu0 0.0
        %1001 = vmatpush1.msra.mxu0 0.0
        %1002 = vmatprep.subr.mxu0 0.0
        %1003 = vmatpush1.msra.mxu0 0.0
        %1004 = vmatprep.subr.mxu0 0.0
        %1005 = vmatpush1.msra.mxu0 0.0
        %1006 = vmatprep.subr.mxu0 0.0
        %1007 = vmatpush1.msra.mxu0 0.0
        %1008 = vmatprep.subr.mxu0 0.0
        %1009 = vmatpush1.msra.mxu0 0.0
        %1010 = vmatprep.subr.mxu0 0.0
        %1011 = vmatpush1.msra.mxu0 0.0
        %1012 = vmatprep.subr.mxu0 0.0
        %1013 = vmatpush1.msra.mxu0 0.0
        %1014 = vmatprep.subr.mxu0 0.0
        %1015 = vmatpush1.msra.mxu0 0.0
        %1016 = vmatprep.subr.mxu0 0.0
        %1017 = vmatpush1.msra.mxu0 0.0
        %1018 = vmatprep.subr.mxu0 0.0
        %1019 = vmatpush1.msra.mxu0 0.0
        %1020 = vmatprep.subr.mxu0 0.0
        %1021 = vmatpush1.msra.mxu0 0.0
        %1022 = vmatprep.subr.mxu0 0.0
        %1023 = vmatpush1.msra.mxu0 0.0
        %1024 = vmatprep.subr.mxu0 0.0
        %1025 = vmatpush1.msra.mxu0 0.0
        %1026 = vmatprep.subr.mxu0 0.0
        %1027 = vmatpush1.msra.mxu0 0.0
        %1028 = vmatprep.subr.mxu0 0.0
        %1029 = vmatpush1.msra.mxu0 0.0
        %1030 = vmatprep.subr.mxu0 0.0
        %1031 = vmatpush1.msra.mxu0 0.0
        %1032 = vmatprep.subr.mxu0 0.0
        %1033 = vmatpush1.msra.mxu0 0.0
        %1034 = vmatprep.subr.mxu0 0.0
        %1035 = vmatpush1.msra.mxu0 0.0
        %1036 = vmatprep.subr.mxu0 0.0
        %1037 = vmatpush1.msra.mxu0 0.0
        %1038 = vmatprep.subr.mxu0 0.0
        %1039 = vmatpush1.msra.mxu0 0.0
        %1040 = vmatprep.subr.mxu0 0.0
        %1041 = vmatpush1.msra.mxu0 0.0
        %1042 = vmatprep.subr.mxu0 0.0
        %1043 = vmatpush1.msra.mxu0 0.0
        %1044 = vmatprep.mubr.f32.mxu0 0.0
        %1045 = vmatmul.mubr.f32.gmra.mrb[0].mxu0 %v978
        %v1046 = vpop.f32.mrb[0].mxu0
        %v1047 = vadd.f32 %v976, %v1046
        %v1048 = vpop.f32.mrb[0].mxu0
        %v1049 = vadd.f32 %v976, %v1048
        %1050 = vdwg.mxu0
        %1051 = vmatprep.subr.mxu0 %v945
        %1052 = vmatpush1.msra.mxu0 %v944
        %1053 = vmatprep.subr.mxu0 %v949
        %1054 = vmatpush1.msra.mxu0 %v948
        %1055 = vmatprep.subr.mxu0 %v953
        %1056 = vmatpush1.msra.mxu0 %v952
        %1057 = vmatprep.subr.mxu0 %v957
        %1058 = vmatpush1.msra.mxu0 %v956
        %1059 = vmatprep.subr.mxu0 %v961
        %1060 = vmatpush1.msra.mxu0 %v960
        %1061 = vmatprep.subr.mxu0 %v965
        %1062 = vmatpush1.msra.mxu0 %v964
        %1063 = vmatprep.subr.mxu0 %v969
        %1064 = vmatpush1.msra.mxu0 %v968
        %1065 = vmatprep.subr.mxu0 %v973
        %1066 = vmatpush1.msra.mxu0 %v972
        %1067 = vmatprep.subr.mxu0 0.0
        %1068 = vmatpush1.msra.mxu0 0.0
        %1069 = vmatprep.subr.mxu0 0.0
        %1070 = vmatpush1.msra.mxu0 0.0
        %1071 = vmatprep.subr.mxu0 0.0
        %1072 = vmatpush1.msra.mxu0 0.0
        %1073 = vmatprep.subr.mxu0 0.0
        %1074 = vmatpush1.msra.mxu0 0.0
        %1075 = vmatprep.subr.mxu0 0.0
        %1076 = vmatpush1.msra.mxu0 0.0
        %1077 = vmatprep.subr.mxu0 0.0
        %1078 = vmatpush1.msra.mxu0 0.0
        %1079 = vmatprep.subr.mxu0 0.0
        %1080 = vmatpush1.msra.mxu0 0.0
        %1081 = vmatprep.subr.mxu0 0.0
        %1082 = vmatpush1.msra.mxu0 0.0
        %1083 = vmatprep.subr.mxu0 0.0
        %1084 = vmatpush1.msra.mxu0 0.0
        %1085 = vmatprep.subr.mxu0 0.0
        %1086 = vmatpush1.msra.mxu0 0.0
        %1087 = vmatprep.subr.mxu0 0.0
        %1088 = vmatpush1.msra.mxu0 0.0
        %1089 = vmatprep.subr.mxu0 0.0
        %1090 = vmatpush1.msra.mxu0 0.0
        %1091 = vmatprep.subr.mxu0 0.0
        %1092 = vmatpush1.msra.mxu0 0.0
        %1093 = vmatprep.subr.mxu0 0.0
        %1094 = vmatpush1.msra.mxu0 0.0
        %1095 = vmatprep.subr.mxu0 0.0
        %1096 = vmatpush1.msra.mxu0 0.0
        %1097 = vmatprep.subr.mxu0 0.0
        %1098 = vmatpush1.msra.mxu0 0.0
        %1099 = vmatprep.subr.mxu0 0.0
        %1100 = vmatpush1.msra.mxu0 0.0
        %1101 = vmatprep.subr.mxu0 0.0
        %1102 = vmatpush1.msra.mxu0 0.0
        %1103 = vmatprep.subr.mxu0 0.0
        %1104 = vmatpush1.msra.mxu0 0.0
        %1105 = vmatprep.subr.mxu0 0.0
        %1106 = vmatpush1.msra.mxu0 0.0
        %1107 = vmatprep.subr.mxu0 0.0
        %1108 = vmatpush1.msra.mxu0 0.0
        %1109 = vmatprep.subr.mxu0 0.0
        %1110 = vmatpush1.msra.mxu0 0.0
        %1111 = vmatprep.subr.mxu0 0.0
        %1112 = vmatpush1.msra.mxu0 0.0
        %1113 = vmatprep.subr.mxu0 0.0
        %1114 = vmatpush1.msra.mxu0 0.0
        %1115 = vmatprep.mubr.f32.mxu0 0.0
        %1116 = vmatmul.mubr.f32.gmra.mrb[0].mxu0 %v978
        %v1117 = vpop.f32.mrb[0].mxu0
        %v1118 = vadd.f32 %v976, %v1117
        %v1119 = vpop.f32.mrb[0].mxu0
        %v1120 = vadd.f32 %v976, %v1119
        %1121 = vdwg.mxu0
        %v1126 = vcombine.low %v1047, %v1049
        %v1127 = vcombine.low %v1118, %v1120
        %v1129 = vunpack.c.l.s4 1966171168
        %v1130 = vunpack.c.0.s8 %v1129
        %v1131 = vlaneseq
        %v1132 = vshrl.u32 %v1131, 7
        %v1133 = vsub.s32 %v1130, %v1132
        %v1134 = vrot.slane %v1126, %v1133
        %v1136 = vunpack.c.l.s4 1966171168
        %v1137 = vunpack.c.0.s8 %v1136
        %v1138 = vlaneseq
        %v1139 = vshrl.u32 %v1138, 7
        %v1140 = vsub.s32 %v1137, %v1139
        %v1141 = vrot.slane %v1127, %v1140
        %v1142 = vcombine.low %v1134, %v1141
        %v1144 = vunpack.c.l.s4 1966171168
        %v1145 = vunpack.c.0.s8 %v1144
        %v1146 = vlaneseq
        %v1147 = vshrl.u32 %v1146, 7
        %v1148 = vsub.s32 %v1145, %v1147
        %v1149 = vrot.slane %v1142, %v1148
        %v1151 = vlaneseq
        %vm1152 = vcmp.ge.s32.totalorder %v1151, 0
        %vm1153 = vcmp.lt.s32.totalorder %v1151, 512
        %vm1154 = vmand %vm1152, %vm1153
        %1155 = vst.msk [vmem:[%s273] sm:$0xf] %vm1154, %v1149
        %s1156 = sand.u32 %s182, 1
        %s1157 = scalar_lea.sflag [#allocation4], %s1156
        %s1158 = sand.u32 %s182, 1
        %s1159 = smul.addr %s1158, 4
        %s1160 = scalar_lea.vmem [#allocation3], %s1159
        // Predicated region
        $region49: #{simple_net_forward.1} parent=47 // pred_check
          %p1161 = pneg %p192
        $region50: #{simple_net_forward.1} parent=47 // pred_check_branch
          %1163 = sbr.rel (%p1161) target = $region52
        $region51: #{simple_net_forward.1} parent=47 // pred_region
          %s1164 = smul.u32 4, %s22
          %s1166 = ssub.s32 64, 64
          %1167 = vsyncadd %s1157, %s1166
          %s1168 = smul.addr %s1164, 16
          %s1169 = scalar_lea.hbm %s7, %s1168
          %s1171 = sshll.u32 %s1160, 4
          %s1172 = int_to_ptr.vmem [resolvable:$true] %s1171
          %1174 = dma.vmem_to_hbm [thread:$0]  %s1172, 64, %s1169, %s1157
        $region52: #{simple_net_forward.1} parent=47 // pred_fallthru
          _
      $region48: #{simple_net_forward.1} parent=5 // pred_fallthru
        _
      %p1175 = scmp.le.s32.totalorder 2, %s17
      // Predicated region
      $region53: #{simple_net_forward.1} parent=5 // pred_check
        %p1176 = pneg %p1175
      $region54: #{simple_net_forward.1} parent=5 // pred_check_branch
        %1178 = sbr.rel (%p1176) target = $region56
      $region55: #{simple_net_forward.1} parent=5 // pred_region
        %s1179 = ssub.s32 %s17, 2
        // Predicated region
        $region57: #{simple_net_forward.1} parent=55 // pred_check
          %p1180 = pneg %p198
        $region58: #{simple_net_forward.1} parent=55 // pred_check_branch
          %1182 = sbr.rel (%p1180) target = $region60
        $region59: #{simple_net_forward.1} parent=55 // pred_region
          %s1183 = sand.u32 %s183, 1
          %s1184 = scalar_lea.sflag [#allocation4], %s1183
          %s1185 = sand.u32 %s183, 1
          %s1186 = smul.addr %s1185, 4
          %s1187 = scalar_lea.vmem [#allocation3], %s1186
          %1188 = dma.done %s1184, 64
        $region60: #{simple_net_forward.1} parent=55 // pred_fallthru
          _
      $region56: #{simple_net_forward.1} parent=5 // pred_fallthru
        _
    $region6: #{simple_net_forward.1} parent=1 // loop_footer
      %s21 = sadd.s32 1, %s17
    $region7: #{simple_net_forward.1} parent=1 // loop_footer_branch
      %16 = sbr.rel target = $region3
    $region8: #{simple_net_forward.1} parent=1 // loop_exit
      _
    %1189 = vsyncpa [#allocation4], 1
    %s1190 = scalar_lea.sflag [#allocation4], 1
    %1191 = vsyncpa %s1190, 1

</llo_original>
